<compile_context>
chip_gen: v5e
topology: v5e:2x2
jax: 0.10.0
libtpu: 0.0.40
codegen_flags: <defaults>
</compile_context>

<pallas_src>
import functools

import jax
import jax.numpy as jnp
from jax.experimental import pallas as pl
from jax.experimental.pallas import tpu as pltpu

SEQ_SIZE = 6                 # seq_size in BandIndex.__init__
DISTANCE = 5                 # distance in BandIndex.__init__
ORIGINAL_FEATURE_SIZE = 16   # number of spline knots (spectral bands)
N_CHANNELS = 256             # spline channels (e.g. pixels); lane dimension

SEQ_PAD = 8                  # SEQ_SIZE rounded up to one sublane tile
LANE_TILE_CAP = 2048         # max lane tile; ~0.5 MiB per buffered tile at f32


def _round_up(x, m):
    return ((x + m - 1) // m) * m


# ----------------------------------------------------------------------------
# glue: natural cubic spline coefficients (the "spline" object the module gets)
# Built ONCE per spline (does not depend on the learned raw_index).
# ----------------------------------------------------------------------------
def natural_cubic_spline_coeffs(t, y):
    """t: (K,), y: (K, N).  Per-interval a,b,c,d (K-1, N) so that on interval i:
       S(x) = a + b*f + c*f^2 + d*f^3 with f = x - t[i]."""
    K = t.shape[0]
    h = t[1:] - t[:-1]                                        # (K-1,)
    A = jnp.zeros((K, K), dtype=y.dtype)
    A = A.at[0, 0].set(1.0)
    A = A.at[K - 1, K - 1].set(1.0)
    ridx = jnp.arange(1, K - 1)
    A = A.at[ridx, ridx - 1].set(h[:-1])
    A = A.at[ridx, ridx].set(2.0 * (h[:-1] + h[1:]))
    A = A.at[ridx, ridx + 1].set(h[1:])
    dydx = (y[1:] - y[:-1]) / h[:, None]                      # (K-1, N)
    rhs = jnp.zeros_like(y)
    rhs = rhs.at[1:-1].set(6.0 * (dydx[1:] - dydx[:-1]))
    M = jnp.linalg.solve(A, rhs)                              # second derivatives
    a = y[:-1]
    b = dydx - h[:, None] * (2.0 * M[:-1] + M[1:]) / 6.0
    c = M[:-1] / 2.0
    d = (M[1:] - M[:-1]) / (6.0 * h[:, None])
    return a, b, c, d


def prepare_spline(t, y):
    """Hoisted per-spline prep (mirrors the precomputed `spline` object).

    Stacks the per-interval a/b/c/d coefficient tables plus a ones row (for the
    bias) along the sublane axis, padded to a multiple of 8 sublanes and to a
    lane-tile multiple, so the kernel consumes a single DMA stream."""
    N = y.shape[1]
    a, b, c, d = natural_cubic_spline_coeffs(t, y)            # each (K-1, N)
    ones_row = jnp.ones((1, N), jnp.float32)                  # carries the bias
    table = jnp.concatenate([a, b, c, d, ones_row], axis=0).astype(jnp.float32)
    rows = _round_up(table.shape[0], 8)                       # 4*(K-1)+1=61 -> 64
    n_pad = _round_up(N, 128)
    tile_n = n_pad if n_pad <= LANE_TILE_CAP else LANE_TILE_CAP
    n_pad = _round_up(N, tile_n)
    table = jnp.pad(table, ((0, rows - table.shape[0]), (0, n_pad - N)))
    return {"t": t.astype(jnp.float32), "table": table,
            "n_channels": N, "tile_n": tile_n}


def normalized_indices(raw_index):
    """get_normalized_indices(): sigmoid(raw_index) + distance_vector."""
    normalized_distance = DISTANCE / ORIGINAL_FEATURE_SIZE
    distance_vector = (jnp.full((SEQ_SIZE,), normalized_distance, jnp.float32)
                       * jnp.linspace(0.0, SEQ_SIZE - 1, SEQ_SIZE, dtype=jnp.float32))
    return distance_vector + jax.nn.sigmoid(raw_index)        # (SEQ_SIZE,)


# ----------------------------------------------------------------------------
# Pallas kernel: single fused contraction (spline eval + interval select +
# Linear + bias), lane-dense output tiles.
# ----------------------------------------------------------------------------
def _fused_band_kernel(w_ref, table_ref, o_ref):
    # w_ref:     (SEQ_PAD, R)  folded weights: Linear rows x {one-hot interval
    #            selections scaled by f^0..f^3} ++ bias column ++ zero padding.
    # table_ref: (R, TN)       stacked spline coefficients [a; b; c; d; ones; 0].
    # o_ref:     (SEQ_PAD, TN) lane-dense fused output.
    o_ref[...] = jnp.dot(w_ref[...], table_ref[...],
                         preferred_element_type=jnp.float32)


@functools.partial(jax.jit, static_argnames=("n_channels", "tile_n"))
def band_index_forward(raw_index, lin_w, lin_b, t, table, *, n_channels, tile_n):
    """BandIndex.forward(spline) for seq=True, mode='linear_multi'."""
    S = SEQ_SIZE
    K1 = t.shape[0] - 1                                       # number of intervals
    R, n_pad = table.shape

    indices = normalized_indices(raw_index)                   # (S,)
    # NOTE: indices may exceed t[-1]; like torchcubicspline we extrapolate with
    # the last interval's cubic (bucket clipped to K1-1) -- intended behaviour.
    bucket = jnp.clip(jnp.searchsorted(t, indices, side="right") - 1, 0, K1 - 1)
    f = (indices - t[bucket]).astype(jnp.float32)             # (S,)

    # Fold interval gather + f powers + Linear(+bias) into one (SEQ_PAD, R) matrix:
    #   lin_w @ (f^k * coef_k[bucket]) == (lin_w * f^k) @ onehot(bucket) @ coef_k
    onehot = (bucket[:, None] == jnp.arange(K1)[None, :]).astype(jnp.float32)  # (S, K1)
    fpow = jnp.stack([jnp.ones_like(f), f, f * f, f * f * f])                  # (4, S)
    blocks = [(lin_w * fpow[k][None, :]) @ onehot for k in range(4)]           # (S, K1) x4
    wbig = jnp.concatenate(blocks + [lin_b[:, None]], axis=1)                  # (S, 4*K1+1)
    wbig = jnp.pad(wbig, ((0, SEQ_PAD - S), (0, R - wbig.shape[1])))           # (SEQ_PAD, R)

    out = pl.pallas_call(
        _fused_band_kernel,
        out_shape=jax.ShapeDtypeStruct((SEQ_PAD, n_pad), jnp.float32),
        grid_spec=pltpu.PrefetchScalarGridSpec(
            num_scalar_prefetch=0,
            grid=(n_pad // tile_n,),
            in_specs=[pl.BlockSpec((SEQ_PAD, R), lambda i: (0, 0)),
                      pl.BlockSpec((R, tile_n), lambda i: (0, i))],
            out_specs=pl.BlockSpec((SEQ_PAD, tile_n), lambda i: (0, i)),
        ),
        compiler_params=pltpu.CompilerParams(
            dimension_semantics=("parallel",)),
    )(wbig, table)                                            # (SEQ_PAD, n_pad)

    band = out[:S, :n_channels]                               # drop sublane/lane padding
    # reshape(-1) of the (N, S) Linear output -> PyTorch element order n*S + j.
    return band.T.reshape(-1)


# ----------------------------------------------------------------------------
# pure-JAX reference (same math, no Pallas) for a correctness check
# ----------------------------------------------------------------------------
def band_index_reference(raw_index, lin_w, lin_b, t, a, b, c, d):
    K1 = t.shape[0] - 1
    indices = normalized_indices(raw_index)
    bucket = jnp.clip(jnp.searchsorted(t, indices, side="right") - 1, 0, K1 - 1)
    f = (indices - t[bucket])[:, None]
    band_values = a[bucket] + b[bucket] * f + c[bucket] * (f * f) + d[bucket] * (f * f * f)
    band_values = band_values.T                               # permute(1, 0) -> (N, S)
    return (band_values @ lin_w.T + lin_b).reshape(-1)


if __name__ == "__main__":
    key = jax.random.PRNGKey(0)
    k_val, k_w, k_b, k_y = jax.random.split(key, 4)

    # nn.Parameter(val): val = rand(1) * 10 - 5
    raw_index = jax.random.uniform(k_val, (1,), jnp.float32) * 10.0 - 5.0
    # nn.Linear(seq_size, seq_size) parameters (deterministic synthetic init)
    bound = 1.0 / jnp.sqrt(jnp.float32(SEQ_SIZE))
    lin_w = jax.random.uniform(k_w, (SEQ_SIZE, SEQ_SIZE), jnp.float32, -bound, bound)
    lin_b = jax.random.uniform(k_b, (SEQ_SIZE,), jnp.float32, -bound, bound)
    # synthetic "spline" data: K knots on [0, 1], N channels
    spline_t = jnp.linspace(0.0, 1.0, ORIGINAL_FEATURE_SIZE, dtype=jnp.float32)
    spline_y = jax.random.normal(k_y, (ORIGINAL_FEATURE_SIZE, N_CHANNELS), jnp.float32)

    # The "spline" object passed to forward(): built ONCE (hoisted out of the
    # per-call path, per perf review).
    spline = prepare_spline(spline_t, spline_y)

    out = band_index_forward(raw_index, lin_w, lin_b,
                             spline["t"], spline["table"],
                             n_channels=spline["n_channels"],
                             tile_n=spline["tile_n"])
    out = jax.block_until_ready(out)

    a, b, c, d = natural_cubic_spline_coeffs(spline_t, spline_y)
    ref = band_index_reference(raw_index, lin_w, lin_b, spline_t, a, b, c, d)

    assert out.shape == (N_CHANNELS * SEQ_SIZE,)
    err = jnp.max(jnp.abs(out - ref)) / (jnp.max(jnp.abs(ref)) + 1e-6)
    assert err < 1e-3, f"mismatch vs pure-JAX reference (normalized max err {err})"

    # TODO(synk): seq=False (forward_fsdr) path is just spline.evaluate(indices).reshape(-1);
    # only the seq=True / 'linear_multi' path is kernelized here.
    print("KERNEL_OK")
</pallas_src>

<mosaic_0001>
module attributes {stable_mosaic.version = 11 : i64} {
  func.func @_fused_band_kernel(%arg0: i32, %arg1: memref<8x64xf32, #tpu.memory_space<vmem>>, %arg2: memref<64x256xf32, #tpu.memory_space<vmem>>, %arg3: memref<8x256xf32, #tpu.memory_space<vmem>>) attributes {dimension_semantics = [#tpu.dimension_semantics<parallel>], iteration_bounds = array<i64: 1>, scalar_prefetch = 0 : i64, scratch_operands = 0 : i64, tpu.core_type = #tpu.core_type<tc>, window_params = [{pipeline_mode = #tpu.pipeline_mode<synchronous>, transform_indices = @transform_0, window_bounds = array<i64: 8, 64>}, {transform_indices = @transform_1, window_bounds = array<i64: 64, 256>}, {transform_indices = @transform_2, window_bounds = array<i64: 8, 256>}]} {
    %c0 = arith.constant 0 : index
    %c0_0 = arith.constant 0 : index
    %0 = vector.load %arg1[%c0, %c0_0] : memref<8x64xf32, #tpu.memory_space<vmem>>, vector<8x64xf32>
    %c0_1 = arith.constant 0 : index
    %c0_2 = arith.constant 0 : index
    %1 = vector.load %arg2[%c0_1, %c0_2] : memref<64x256xf32, #tpu.memory_space<vmem>>, vector<64x256xf32>
    %cst = arith.constant dense<0.000000e+00> : vector<8x256xf32>
    %2 = tpu.matmul %0, %1, %cst {dimension_numbers = #tpu.dot_dimension_numbers<[1], [0], [0], [1], [0, 0, 1, 1], [], []>} : vector<8x64xf32>, vector<64x256xf32>, vector<8x256xf32> -> vector<8x256xf32>
    %c0_3 = arith.constant 0 : index
    %c0_4 = arith.constant 0 : index
    %3 = vector.load %arg3[%c0_3, %c0_4] : memref<8x256xf32, #tpu.memory_space<vmem>>, vector<8x256xf32>
    tpu.vector_store %arg3[%c0_3, %c0_4], %2 {strides = array<i32>} : memref<8x256xf32, #tpu.memory_space<vmem>>, vector<8x256xf32>,
    return
  }
  func.func @transform_0(%arg0: i32) -> (i32, i32) {
    %c0_i32 = arith.constant 0 : i32
    %c0_i32_0 = arith.constant 0 : i32
    %c0_i32_1 = arith.constant 0 : i32
    return %c0_i32, %c0_i32_0 : i32, i32
  }
  func.func @transform_1(%arg0: i32) -> (i32, i32) {
    %c0_i32 = arith.constant 0 : i32
    %c0_i32_0 = arith.constant 0 : i32
    return %c0_i32, %arg0 : i32, i32
  }
  func.func @transform_2(%arg0: i32) -> (i32, i32) {
    %c0_i32 = arith.constant 0 : i32
    %c0_i32_0 = arith.constant 0 : i32
    return %c0_i32, %arg0 : i32, i32
  }
}

</mosaic_0001>

<llo_original>
// kernel: custom-call.1
$region0: #{custom-call.1}
  %s0 = inlined_call_operand.vmem [shape: u32[6], index: 0, kind: output, shape index: {}]

// kernel: mul.20
$region0: #{mul.20}
  #allocation0 [shape = 's32[1]{0}', space=sflag, size = 0x4, scoped, tag = 'scoped memory for mul.20']
  %s0 = inlined_call_operand.vmem [shape: f32[6], index: 0, kind: input, shape index: {}, may-alias: {0,1}]
  %s1 = inlined_call_operand.vmem [shape: f32[6], index: 1, kind: input, shape index: {}, may-alias: {0,1}]
  %s2 = inlined_call_operand.vmem [shape: f32[6], index: 2, kind: output, shape index: {}]
  %v3 = vld [vmem:[%s0] sm:$0x1]
  %v4 = vld [vmem:[%s1] sm:$0x1]
  %5 = xla_tuple %v3, %v4
  %6 = xla_tuple %5
  %v7 = vmul.f32 %v3, %v4
  %8 = xla_tuple %v7
  %9 = vst [vmem:[%s2] sm:$0x1] %v7

// kernel: band_index_forward.1
$region0: #{band_index_forward.1}
  #allocation0 [shape = 'u32[]', space=smem, size = 0x4, offset = 0x4, fixed_abs, tag = 'smem constant byte address 0x4 - core index']
  #allocation1 [shape = 'u32[72,128]{1,0:T(1,128)}', space=vmem, size = 0x9000, scoped, tag = 'internal scratch']
  %s0 = inlined_call_operand.vmem [shape: f32[8,64], index: 0, kind: input, shape index: {}]
  %s1 = inlined_call_operand.vmem [shape: f32[64,256], index: 1, kind: input, shape index: {}]
  %s2 = inlined_call_operand.vmem [shape: f32[8,256], index: 2, kind: output, shape index: {}]
  %s3 = sld [smem:[#allocation0]]
  $region18: #{band_index_forward.1} parent=0
    _
  %s5 = ssub.s32 1, %s3
  %s6 = scalar_select 0, %s5, %s3
  // Predicated region
  $region2: #{band_index_forward.1} parent=0 // pred_check
    _
  $region3: #{band_index_forward.1} parent=0 // pred_check_branch
    %8 = sbr.rel (0) target = $region5
  $region4: #{band_index_forward.1} parent=0 // pred_region
    _
  $region5: #{band_index_forward.1} parent=0 // pred_fallthru
    _
  // Predicated region
  $region6: #{band_index_forward.1} parent=0 // pred_check
    _
  $region7: #{band_index_forward.1} parent=0 // pred_check_branch
    %10 = sbr.rel (0) target = $region9
  $region8: #{band_index_forward.1} parent=0 // pred_region
    _
  $region9: #{band_index_forward.1} parent=0 // pred_fallthru
    _
  %v11 = vld [vmem:[%s0] sm:$0xff]
  %v12 = vld [vmem:[%s1] sm:$0xff]
  %v13 = vld [vmem:[%s1 + $0x8] sm:$0xff]
  %v14 = vld [vmem:[%s1 + $0x10] sm:$0xff]
  %v15 = vld [vmem:[%s1 + $0x18] sm:$0xff]
  %v16 = vld [vmem:[%s1 + $0x20] sm:$0xff]
  %v17 = vld [vmem:[%s1 + $0x28] sm:$0xff]
  %v18 = vld [vmem:[%s1 + $0x30] sm:$0xff]
  %v19 = vld [vmem:[%s1 + $0x38] sm:$0xff]
  %v20 = vld [vmem:[%s1 + $0x40] sm:$0xff]
  %v21 = vld [vmem:[%s1 + $0x48] sm:$0xff]
  %v22 = vld [vmem:[%s1 + $0x50] sm:$0xff]
  %v23 = vld [vmem:[%s1 + $0x58] sm:$0xff]
  %v24 = vld [vmem:[%s1 + $0x60] sm:$0xff]
  %v25 = vld [vmem:[%s1 + $0x68] sm:$0xff]
  %v26 = vld [vmem:[%s1 + $0x70] sm:$0xff]
  %v27 = vld [vmem:[%s1 + $0x78] sm:$0xff]
  %vm28 = vcmask 523264
  %v30 = vsel %vm28, %v11, 0
  %32 = vmatpush.msra.mxu0 0.0
  %33 = vmatpush.msra.mxu0 0.0
  %34 = vmatpush.msra.mxu0 0.0
  %35 = vmatpush.msra.mxu0 0.0
  %36 = vmatpush.msra.mxu0 0.0
  %37 = vmatpush.msra.mxu0 0.0
  %38 = vmatpush.msra.mxu0 0.0
  %39 = vmatpush.msra.mxu0 0.0
  %40 = vmatpush.msra.mxu0 %v26
  %41 = vmatpush.msra.mxu0 %v24
  %42 = vmatpush.msra.mxu0 %v22
  %43 = vmatpush.msra.mxu0 %v20
  %44 = vmatpush.msra.mxu0 %v18
  %45 = vmatpush.msra.mxu0 %v16
  %46 = vmatpush.msra.mxu0 %v14
  %47 = vmatpush.msra.mxu0 %v12
  %48 = vmatmul.f32.gmra.mxu0 %v30
  %v49 = vpop.f32.mrf.mxu0
  %v50 = vadd.f32 0.0, %v49
  %51 = vdwg.mxu0
  %52 = vmatpush.msra.mxu0 0.0
  %53 = vmatpush.msra.mxu0 0.0
  %54 = vmatpush.msra.mxu0 0.0
  %55 = vmatpush.msra.mxu0 0.0
  %56 = vmatpush.msra.mxu0 0.0
  %57 = vmatpush.msra.mxu0 0.0
  %58 = vmatpush.msra.mxu0 0.0
  %59 = vmatpush.msra.mxu0 0.0
  %60 = vmatpush.msra.mxu0 %v27
  %61 = vmatpush.msra.mxu0 %v25
  %62 = vmatpush.msra.mxu0 %v23
  %63 = vmatpush.msra.mxu0 %v21
  %64 = vmatpush.msra.mxu0 %v19
  %65 = vmatpush.msra.mxu0 %v17
  %66 = vmatpush.msra.mxu0 %v15
  %67 = vmatpush.msra.mxu0 %v13
  %68 = vmatmul.f32.gmra.mxu0 %v30
  %v69 = vpop.f32.mrf.mxu0
  %v70 = vadd.f32 0.0, %v69
  %71 = vdwg.mxu0
  %72 = vst [vmem:[%s2] sm:$0xff] %v50
  %73 = vst [vmem:[%s2 + $0x8] sm:$0xff] %v70
  // Predicated region
  $region10: #{band_index_forward.1} parent=0 // pred_check
    _
  $region11: #{band_index_forward.1} parent=0 // pred_check_branch
    %75 = sbr.rel (0) target = $region13
  $region12: #{band_index_forward.1} parent=0 // pred_region
    _
  $region13: #{band_index_forward.1} parent=0 // pred_fallthru
    _
  // Predicated region
  $region14: #{band_index_forward.1} parent=0 // pred_check
    _
  $region15: #{band_index_forward.1} parent=0 // pred_check_branch
    %77 = sbr.rel (0) target = $region17
  $region16: #{band_index_forward.1} parent=0 // pred_region
    _
  $region17: #{band_index_forward.1} parent=0 // pred_fallthru
    _

</llo_original>
